<compile_context>
chip_gen: v6e
topology: v6e:2x2x1
jax: 0.10.0
libtpu: 0.0.40
codegen_flags: <defaults>
</compile_context>

<pallas_src>
import jax
import jax.numpy as jnp
import numpy as np
from jax.experimental import pallas as pl
from jax.experimental.pallas import tpu as pltpu


def _round_up(x, m):
    return (x + m - 1) // m * m


# --------------------------------------------------------------------------
# Kernel body: one batch tile through the whole MLP.
# --------------------------------------------------------------------------
def dnn_kernel(x_ref, w1_ref, b1_ref, w2_ref, b2_ref, w3_ref, b3_ref, o_ref):
    # in-kernel cast to bf16 (x arrives as f32 straight from HBM)
    x = x_ref[...].astype(jnp.bfloat16)                       # (tile_b, in_dim)
    # fc1 + ReLU : bf16 MXU matmul, f32 accumulate, f32 bias/ReLU
    h1 = jnp.dot(x, w1_ref[...], preferred_element_type=jnp.float32) + b1_ref[...]
    h1 = jnp.maximum(h1, 0.0).astype(jnp.bfloat16)
    # fc2 + ReLU
    h2 = jnp.dot(h1, w2_ref[...], preferred_element_type=jnp.float32) + b2_ref[...]
    h2 = jnp.maximum(h2, 0.0).astype(jnp.bfloat16)
    # fc3 (no activation); f32, lane-dense full-width store
    o_ref[...] = jnp.dot(h2, w3_ref[...], preferred_element_type=jnp.float32) + b3_ref[...]


# --------------------------------------------------------------------------
# One-time weight preprocessing (do NOT repeat per forward call).
# --------------------------------------------------------------------------
def prepare_params(params):
    """Pad hidden/out lane dims to multiples of 128 and cast weights to bf16
    (MXU operands) / biases to f32 (VPU adds). Weights stored as (in, out)."""
    w1, b1, w2, b2, w3, b3 = params
    in_dim, hid = w1.shape
    out_dim = w3.shape[1]
    hid_p = _round_up(hid, 128)
    out_p = _round_up(out_dim, 128)

    def pad2(a, r, c):
        return jnp.pad(a, ((0, r - a.shape[0]), (0, c - a.shape[1])))

    return dict(
        w1=pad2(w1, in_dim, hid_p).astype(jnp.bfloat16),
        b1=pad2(b1, 1, hid_p).astype(jnp.float32),
        w2=pad2(w2, hid_p, hid_p).astype(jnp.bfloat16),
        b2=pad2(b2, 1, hid_p).astype(jnp.float32),
        w3=pad2(w3, hid_p, out_p).astype(jnp.bfloat16),
        b3=pad2(b3, 1, out_p).astype(jnp.float32),
        in_dim=in_dim, hid_p=hid_p, out_dim=out_dim, out_p=out_p,
    )


# --------------------------------------------------------------------------
# Batch tile selection: multiple of 16 (bf16 sublane packing), >=2 grid steps
# when the batch allows it (v7x megacore), and bounded batch-padding waste.
# --------------------------------------------------------------------------
def _choose_tile_b(B):
    if B <= 32:
        return B                                   # single full-dim block, zero padding
    cands = [t for t in (512, 256, 128, 64, 32, 16) if 2 * t <= _round_up(B, 16)]
    low_waste = [t for t in cands if 4 * (_round_up(B, t) - B) <= B]   # <=25% waste
    if low_waste:
        return max(low_waste)
    return min(cands, key=lambda t: _round_up(B, t) - B)


def _make_call(tile_b, b_pad, in_dim, hid_p, out_p, single_buffer_weights,
               vmem_limit, cost):
    grid = (b_pad // tile_b,)
    x_spec = pl.BlockSpec((tile_b, in_dim), lambda i: (i, 0))
    o_spec = pl.BlockSpec((tile_b, out_p), lambda i: (i, 0))

    if single_buffer_weights:
        # grid-invariant residents: no double buffer needed -> halve weight VMEM
        res = lambda shape: pl.BlockSpec(shape, lambda i: (0, 0),
                                         pipeline_mode=pl.Buffered(1))
    else:
        res = lambda shape: pl.BlockSpec(shape, lambda i: (0, 0))

    return pl.pallas_call(
        dnn_kernel,
        out_shape=jax.ShapeDtypeStruct((b_pad, out_p), jnp.float32),
        grid=grid,
        in_specs=[
            x_spec,
            res((in_dim, hid_p)), res((1, hid_p)),
            res((hid_p, hid_p)), res((1, hid_p)),
            res((hid_p, out_p)), res((1, out_p)),
        ],
        out_specs=o_spec,
        compiler_params=pltpu.CompilerParams(
            dimension_semantics=("parallel",),       # megacore sharding on v7x
            vmem_limit_bytes=vmem_limit,
        ),
        cost_estimate=cost,
    )


def dnn_forward(x, prepared, n_vertices):
    """x: (B, n_vertices, seq_len) f32 -> (B, n_vertices, n_vertices) f32.
    `prepared` comes from prepare_params() (one-time weight preprocessing).
    Left un-jitted so the Buffered(1) compile fallback below can take effect."""
    p = prepared
    B = x.shape[0]
    x_flat = x.reshape(B, -1)                                   # (B, n_vertices*seq_len)
    in_dim, hid_p, out_dim, out_p = p["in_dim"], p["hid_p"], p["out_dim"], p["out_p"]
    assert x_flat.shape[1] == in_dim

    tile_b = _choose_tile_b(B)
    b_pad = _round_up(B, tile_b)
    if b_pad != B:                                              # batch pad only (no lane pad/cast)
        x_flat = jnp.pad(x_flat, ((0, b_pad - B), (0, 0)))

    # ---- VMEM budget: resident weights + streamed x/out tiles + headroom ----
    w_elems = p["w1"].size + p["w2"].size + p["w3"].size
    b_elems = p["b1"].size + p["b2"].size + p["b3"].size

    def budget(weight_bufs):
        return (weight_bufs * (2 * w_elems + 4 * b_elems)       # resident weights/biases
                + 2 * tile_b * (in_dim * 4 + out_p * 4)         # double-buffered x / out (f32)
                + 4 * tile_b * hid_p * 4)                       # h1/h2 temporaries + headroom

    try:
        vmem_cap = int(pltpu.get_tpu_info().vmem_capacity_bytes)
    except Exception:
        vmem_cap = 64 * 2 ** 20                                 # conservative (v7x-sized) fallback
    vmem_cap_budget = (vmem_cap * 3) // 4                       # leave compiler headroom

    def vmem_limit(weight_bufs):
        return int(min(vmem_cap_budget, max(32 * 2 ** 20, 2 * budget(weight_bufs))))

    flops = 2 * b_pad * (in_dim * hid_p + hid_p * hid_p + hid_p * out_p)
    bytes_accessed = (b_pad * in_dim * 4 + 2 * w_elems + 4 * b_elems + b_pad * out_p * 4)
    cost = pl.CostEstimate(flops=flops, transcendentals=0, bytes_accessed=bytes_accessed)

    # TODO(synk): for very large hidden sizes (resident bf16 weights > ~half of
    # VMEM, e.g. hidden >= 4096 on v7x's 64 MiB) switch to a K-tiled grid with
    # an f32 VMEM accumulator (P3) instead of keeping all weights resident.

    args = (x_flat, p["w1"], p["b1"], p["w2"], p["b2"], p["w3"], p["b3"])
    try:
        out_flat = _make_call(tile_b, b_pad, in_dim, hid_p, out_p,
                              True, vmem_limit(1), cost)(*args)
    except Exception:
        # pl.Buffered(1) unsupported on this jax/Mosaic build -> default double buffering
        out_flat = _make_call(tile_b, b_pad, in_dim, hid_p, out_p,
                              False, vmem_limit(2), cost)(*args)

    if b_pad != B or out_p != out_dim:
        out_flat = out_flat[:B, :out_dim]
    return out_flat.reshape(B, n_vertices, n_vertices)


# --------------------------------------------------------------------------
# Parameter init matching torch.nn.Linear (U(-1/sqrt(fan_in), 1/sqrt(fan_in))),
# stored transposed as (in, out).
# --------------------------------------------------------------------------
def init_params(key, n_vertices, seq_len, hidden_size):
    in_dim = n_vertices * seq_len
    out_dim = n_vertices * n_vertices
    keys = jax.random.split(key, 6)

    def lin(kw, kb, fan_in, fan_out):
        bound = 1.0 / np.sqrt(fan_in)
        w = jax.random.uniform(kw, (fan_in, fan_out), jnp.float32, -bound, bound)
        b = jax.random.uniform(kb, (1, fan_out), jnp.float32, -bound, bound)
        return w, b

    w1, b1 = lin(keys[0], keys[1], in_dim, hidden_size)
    w2, b2 = lin(keys[2], keys[3], hidden_size, hidden_size)
    w3, b3 = lin(keys[4], keys[5], hidden_size, out_dim)
    return (w1, b1, w2, b2, w3, b3)


def dnn_ref_f32(x, params, n_vertices):
    """Pure-JAX f32 reference (exact module semantics)."""
    w1, b1, w2, b2, w3, b3 = params
    xf = x.reshape(x.shape[0], -1)
    h = jnp.maximum(xf @ w1 + b1, 0.0)
    h = jnp.maximum(h @ w2 + b2, 0.0)
    o = h @ w3 + b3
    return o.reshape(x.shape[0], n_vertices, n_vertices)


def dnn_ref_bf16(x, params, n_vertices):
    """Pure-JAX reference using the same bf16-matmul / f32-accumulate recipe."""
    w1, b1, w2, b2, w3, b3 = params
    bf = jnp.bfloat16
    xf = x.reshape(x.shape[0], -1).astype(bf)
    h = jnp.dot(xf, w1.astype(bf), preferred_element_type=jnp.float32) + b1
    h = jnp.maximum(h, 0.0).astype(bf)
    h = jnp.dot(h, w2.astype(bf), preferred_element_type=jnp.float32) + b2
    h = jnp.maximum(h, 0.0).astype(bf)
    o = jnp.dot(h, w3.astype(bf), preferred_element_type=jnp.float32) + b3
    return o.reshape(x.shape[0], n_vertices, n_vertices)


if __name__ == "__main__":
    n_vertices = 8
    seq_len = 8
    hidden_size = 32
    batch = 4

    key = jax.random.PRNGKey(0)
    k_x, k_p = jax.random.split(key)
    x = jax.random.normal(k_x, (batch, n_vertices, seq_len), dtype=jnp.float32)
    params = init_params(k_p, n_vertices, seq_len, hidden_size)

    prepared = prepare_params(params)          # one-time weight pad/cast
    out = dnn_forward(x, prepared, n_vertices)
    out = jax.block_until_ready(out)
    assert out.shape == (batch, n_vertices, n_vertices)

    # exact check against a reference that uses the same bf16-dot recipe
    ref_bf16 = dnn_ref_bf16(x, params, n_vertices)
    np.testing.assert_allclose(np.asarray(out), np.asarray(ref_bf16),
                               rtol=1e-4, atol=1e-4)

    # semantic sanity check against the full-f32 module math (bf16 rounding slack)
    ref_f32 = dnn_ref_f32(x, params, n_vertices)
    np.testing.assert_allclose(np.asarray(out), np.asarray(ref_f32),
                               rtol=1e-1, atol=1e-1)

    print("KERNEL_OK")
</pallas_src>

<mosaic_0001>
module attributes {stable_mosaic.version = 11 : i64} {
  func.func @dnn_kernel(%arg0: i32, %arg1: memref<4x64xf32, #tpu.memory_space<vmem>>, %arg2: memref<64x128xbf16, #tpu.memory_space<vmem>>, %arg3: memref<1x128xf32, #tpu.memory_space<vmem>>, %arg4: memref<128x128xbf16, #tpu.memory_space<vmem>>, %arg5: memref<1x128xf32, #tpu.memory_space<vmem>>, %arg6: memref<128x128xbf16, #tpu.memory_space<vmem>>, %arg7: memref<1x128xf32, #tpu.memory_space<vmem>>, %arg8: memref<4x128xf32, #tpu.memory_space<vmem>>) attributes {dimension_semantics = [#tpu.dimension_semantics<parallel>], iteration_bounds = array<i64: 1>, scalar_prefetch = 0 : i64, scratch_operands = 0 : i64, tpu.core_type = #tpu.core_type<tc>, window_params = [{transform_indices = @transform_0, window_bounds = array<i64: 4, 64>}, {pipeline_mode = #tpu.pipeline_mode<synchronous>, transform_indices = @transform_1, window_bounds = array<i64: 64, 128>}, {pipeline_mode = #tpu.pipeline_mode<synchronous>, transform_indices = @transform_2, window_bounds = array<i64: 1, 128>}, {pipeline_mode = #tpu.pipeline_mode<synchronous>, transform_indices = @transform_3, window_bounds = array<i64: 128, 128>}, {pipeline_mode = #tpu.pipeline_mode<synchronous>, transform_indices = @transform_4, window_bounds = array<i64: 1, 128>}, {pipeline_mode = #tpu.pipeline_mode<synchronous>, transform_indices = @transform_5, window_bounds = array<i64: 128, 128>}, {pipeline_mode = #tpu.pipeline_mode<synchronous>, transform_indices = @transform_6, window_bounds = array<i64: 1, 128>}, {transform_indices = @transform_7, window_bounds = array<i64: 4, 128>}]} {
    %c0 = arith.constant 0 : index
    %c0_0 = arith.constant 0 : index
    %0 = vector.load %arg1[%c0, %c0_0] : memref<4x64xf32, #tpu.memory_space<vmem>>, vector<4x64xf32>
    %1 = arith.truncf %0 : vector<4x64xf32> to vector<4x64xbf16>
    %c0_1 = arith.constant 0 : index
    %c0_2 = arith.constant 0 : index
    %2 = vector.load %arg2[%c0_1, %c0_2] : memref<64x128xbf16, #tpu.memory_space<vmem>>, vector<64x128xbf16>
    %cst = arith.constant dense<0.000000e+00> : vector<4x128xf32>
    %3 = tpu.matmul %1, %2, %cst {dimension_numbers = #tpu.dot_dimension_numbers<[1], [0], [0], [1], [0, 0, 1, 1], [], []>} : vector<4x64xbf16>, vector<64x128xbf16>, vector<4x128xf32> -> vector<4x128xf32>
    %c0_3 = arith.constant 0 : index
    %c0_4 = arith.constant 0 : index
    %4 = vector.load %arg3[%c0_3, %c0_4] : memref<1x128xf32, #tpu.memory_space<vmem>>, vector<1x128xf32>
    %5 = vector.broadcast %4 : vector<1x128xf32> to vector<4x128xf32>
    %6 = arith.addf %3, %5 : vector<4x128xf32>
    %cst_5 = arith.constant 0.000000e+00 : f32
    %7 = vector.broadcast %cst_5 : f32 to vector<4x128xf32>
    %8 = arith.maximumf %6, %7 : vector<4x128xf32>
    %9 = arith.truncf %8 : vector<4x128xf32> to vector<4x128xbf16>
    %c0_6 = arith.constant 0 : index
    %c0_7 = arith.constant 0 : index
    %10 = vector.load %arg4[%c0_6, %c0_7] : memref<128x128xbf16, #tpu.memory_space<vmem>>, vector<128x128xbf16>
    %cst_8 = arith.constant dense<0.000000e+00> : vector<4x128xf32>
    %11 = tpu.matmul %9, %10, %cst_8 {dimension_numbers = #tpu.dot_dimension_numbers<[1], [0], [0], [1], [0, 0, 1, 1], [], []>} : vector<4x128xbf16>, vector<128x128xbf16>, vector<4x128xf32> -> vector<4x128xf32>
    %c0_9 = arith.constant 0 : index
    %c0_10 = arith.constant 0 : index
    %12 = vector.load %arg5[%c0_9, %c0_10] : memref<1x128xf32, #tpu.memory_space<vmem>>, vector<1x128xf32>
    %13 = vector.broadcast %12 : vector<1x128xf32> to vector<4x128xf32>
    %14 = arith.addf %11, %13 : vector<4x128xf32>
    %cst_11 = arith.constant 0.000000e+00 : f32
    %15 = vector.broadcast %cst_11 : f32 to vector<4x128xf32>
    %16 = arith.maximumf %14, %15 : vector<4x128xf32>
    %17 = arith.truncf %16 : vector<4x128xf32> to vector<4x128xbf16>
    %c0_12 = arith.constant 0 : index
    %c0_13 = arith.constant 0 : index
    %18 = vector.load %arg6[%c0_12, %c0_13] : memref<128x128xbf16, #tpu.memory_space<vmem>>, vector<128x128xbf16>
    %cst_14 = arith.constant dense<0.000000e+00> : vector<4x128xf32>
    %19 = tpu.matmul %17, %18, %cst_14 {dimension_numbers = #tpu.dot_dimension_numbers<[1], [0], [0], [1], [0, 0, 1, 1], [], []>} : vector<4x128xbf16>, vector<128x128xbf16>, vector<4x128xf32> -> vector<4x128xf32>
    %c0_15 = arith.constant 0 : index
    %c0_16 = arith.constant 0 : index
    %20 = vector.load %arg7[%c0_15, %c0_16] : memref<1x128xf32, #tpu.memory_space<vmem>>, vector<1x128xf32>
    %21 = vector.broadcast %20 : vector<1x128xf32> to vector<4x128xf32>
    %22 = arith.addf %19, %21 : vector<4x128xf32>
    %c0_17 = arith.constant 0 : index
    %c0_18 = arith.constant 0 : index
    %23 = vector.load %arg8[%c0_17, %c0_18] : memref<4x128xf32, #tpu.memory_space<vmem>>, vector<4x128xf32>
    tpu.vector_store %arg8[%c0_17, %c0_18], %22 {strides = array<i32>} : memref<4x128xf32, #tpu.memory_space<vmem>>, vector<4x128xf32>,
    return
  }
  func.func @transform_0(%arg0: i32) -> (i32, i32) {
    %c0_i32 = arith.constant 0 : i32
    %c0_i32_0 = arith.constant 0 : i32
    return %arg0, %c0_i32 : i32, i32
  }
  func.func @transform_1(%arg0: i32) -> (i32, i32) {
    %c0_i32 = arith.constant 0 : i32
    %c0_i32_0 = arith.constant 0 : i32
    %c0_i32_1 = arith.constant 0 : i32
    return %c0_i32, %c0_i32_0 : i32, i32
  }
  func.func @transform_2(%arg0: i32) -> (i32, i32) {
    %c0_i32 = arith.constant 0 : i32
    %c0_i32_0 = arith.constant 0 : i32
    %c0_i32_1 = arith.constant 0 : i32
    return %c0_i32, %c0_i32_0 : i32, i32
  }
  func.func @transform_3(%arg0: i32) -> (i32, i32) {
    %c0_i32 = arith.constant 0 : i32
    %c0_i32_0 = arith.constant 0 : i32
    %c0_i32_1 = arith.constant 0 : i32
    return %c0_i32, %c0_i32_0 : i32, i32
  }
  func.func @transform_4(%arg0: i32) -> (i32, i32) {
    %c0_i32 = arith.constant 0 : i32
    %c0_i32_0 = arith.constant 0 : i32
    %c0_i32_1 = arith.constant 0 : i32
    return %c0_i32, %c0_i32_0 : i32, i32
  }
  func.func @transform_5(%arg0: i32) -> (i32, i32) {
    %c0_i32 = arith.constant 0 : i32
    %c0_i32_0 = arith.constant 0 : i32
    %c0_i32_1 = arith.constant 0 : i32
    return %c0_i32, %c0_i32_0 : i32, i32
  }
  func.func @transform_6(%arg0: i32) -> (i32, i32) {
    %c0_i32 = arith.constant 0 : i32
    %c0_i32_0 = arith.constant 0 : i32
    %c0_i32_1 = arith.constant 0 : i32
    return %c0_i32, %c0_i32_0 : i32, i32
  }
  func.func @transform_7(%arg0: i32) -> (i32, i32) {
    %c0_i32 = arith.constant 0 : i32
    %c0_i32_0 = arith.constant 0 : i32
    return %arg0, %c0_i32 : i32, i32
  }
}

module attributes {stable_mosaic.version = 11 : i64} {
  func.func @dnn_kernel(%arg0: i32, %arg1: memref<4x64xf32, #tpu.memory_space<vmem>>, %arg2: memref<64x128xbf16, #tpu.memory_space<vmem>>, %arg3: memref<1x128xf32, #tpu.memory_space<vmem>>, %arg4: memref<128x128xbf16, #tpu.memory_space<vmem>>, %arg5: memref<1x128xf32, #tpu.memory_space<vmem>>, %arg6: memref<128x128xbf16, #tpu.memory_space<vmem>>, %arg7: memref<1x128xf32, #tpu.memory_space<vmem>>, %arg8: memref<4x128xf32, #tpu.memory_space<vmem>>) attributes {dimension_semantics = [#tpu.dimension_semantics<parallel>], iteration_bounds = array<i64: 1>, scalar_prefetch = 0 : i64, scratch_operands = 0 : i64, tpu.core_type = #tpu.core_type<tc>, window_params = [{transform_indices = @transform_0, window_bounds = array<i64: 4, 64>}, {pipeline_mode = #tpu.pipeline_mode<synchronous>, transform_indices = @transform_1, window_bounds = array<i64: 64, 128>}, {pipeline_mode = #tpu.pipeline_mode<synchronous>, transform_indices = @transform_2, window_bounds = array<i64: 1, 128>}, {pipeline_mode = #tpu.pipeline_mode<synchronous>, transform_indices = @transform_3, window_bounds = array<i64: 128, 128>}, {pipeline_mode = #tpu.pipeline_mode<synchronous>, transform_indices = @transform_4, window_bounds = array<i64: 1, 128>}, {pipeline_mode = #tpu.pipeline_mode<synchronous>, transform_indices = @transform_5, window_bounds = array<i64: 128, 128>}, {pipeline_mode = #tpu.pipeline_mode<synchronous>, transform_indices = @transform_6, window_bounds = array<i64: 1, 128>}, {transform_indices = @transform_7, window_bounds = array<i64: 4, 128>}]} {
    %c0 = arith.constant 0 : index
    %c0_0 = arith.constant 0 : index
    %0 = vector.load %arg1[%c0, %c0_0] : memref<4x64xf32, #tpu.memory_space<vmem>>, vector<4x64xf32>
    %1 = arith.truncf %0 : vector<4x64xf32> to vector<4x64xbf16>
    %c0_1 = arith.constant 0 : index
    %c0_2 = arith.constant 0 : index
    %2 = vector.load %arg2[%c0_1, %c0_2] : memref<64x128xbf16, #tpu.memory_space<vmem>>, vector<64x128xbf16>
    %cst = arith.constant dense<0.000000e+00> : vector<4x128xf32>
    %3 = tpu.matmul %1, %2, %cst {dimension_numbers = #tpu.dot_dimension_numbers<[1], [0], [0], [1], [0, 0, 1, 1], [], []>} : vector<4x64xbf16>, vector<64x128xbf16>, vector<4x128xf32> -> vector<4x128xf32>
    %c0_3 = arith.constant 0 : index
    %c0_4 = arith.constant 0 : index
    %4 = vector.load %arg3[%c0_3, %c0_4] : memref<1x128xf32, #tpu.memory_space<vmem>>, vector<1x128xf32>
    %5 = vector.broadcast %4 : vector<1x128xf32> to vector<4x128xf32>
    %6 = arith.addf %3, %5 : vector<4x128xf32>
    %cst_5 = arith.constant 0.000000e+00 : f32
    %7 = vector.broadcast %cst_5 : f32 to vector<4x128xf32>
    %8 = arith.maximumf %6, %7 : vector<4x128xf32>
    %9 = arith.truncf %8 : vector<4x128xf32> to vector<4x128xbf16>
    %c0_6 = arith.constant 0 : index
    %c0_7 = arith.constant 0 : index
    %10 = vector.load %arg4[%c0_6, %c0_7] : memref<128x128xbf16, #tpu.memory_space<vmem>>, vector<128x128xbf16>
    %cst_8 = arith.constant dense<0.000000e+00> : vector<4x128xf32>
    %11 = tpu.matmul %9, %10, %cst_8 {dimension_numbers = #tpu.dot_dimension_numbers<[1], [0], [0], [1], [0, 0, 1, 1], [], []>} : vector<4x128xbf16>, vector<128x128xbf16>, vector<4x128xf32> -> vector<4x128xf32>
    %c0_9 = arith.constant 0 : index
    %c0_10 = arith.constant 0 : index
    %12 = vector.load %arg5[%c0_9, %c0_10] : memref<1x128xf32, #tpu.memory_space<vmem>>, vector<1x128xf32>
    %13 = vector.broadcast %12 : vector<1x128xf32> to vector<4x128xf32>
    %14 = arith.addf %11, %13 : vector<4x128xf32>
    %cst_11 = arith.constant 0.000000e+00 : f32
    %15 = vector.broadcast %cst_11 : f32 to vector<4x128xf32>
    %16 = arith.maximumf %14, %15 : vector<4x128xf32>
    %17 = arith.truncf %16 : vector<4x128xf32> to vector<4x128xbf16>
    %c0_12 = arith.constant 0 : index
    %c0_13 = arith.constant 0 : index
    %18 = vector.load %arg6[%c0_12, %c0_13] : memref<128x128xbf16, #tpu.memory_space<vmem>>, vector<128x128xbf16>
    %cst_14 = arith.constant dense<0.000000e+00> : vector<4x128xf32>
    %19 = tpu.matmul %17, %18, %cst_14 {dimension_numbers = #tpu.dot_dimension_numbers<[1], [0], [0], [1], [0, 0, 1, 1], [], []>} : vector<4x128xbf16>, vector<128x128xbf16>, vector<4x128xf32> -> vector<4x128xf32>
    %c0_15 = arith.constant 0 : index
    %c0_16 = arith.constant 0 : index
    %20 = vector.load %arg7[%c0_15, %c0_16] : memref<1x128xf32, #tpu.memory_space<vmem>>, vector<1x128xf32>
    %21 = vector.broadcast %20 : vector<1x128xf32> to vector<4x128xf32>
    %22 = arith.addf %19, %21 : vector<4x128xf32>
    %c0_17 = arith.constant 0 : index
    %c0_18 = arith.constant 0 : index
    %23 = vector.load %arg8[%c0_17, %c0_18] : memref<4x128xf32, #tpu.memory_space<vmem>>, vector<4x128xf32>
    tpu.vector_store %arg8[%c0_17, %c0_18], %22 {strides = array<i32>} : memref<4x128xf32, #tpu.memory_space<vmem>>, vector<4x128xf32>,
    return
  }
  func.func @transform_0(%arg0: i32) -> (i32, i32) {
    %c0_i32 = arith.constant 0 : i32
    %c0_i32_0 = arith.constant 0 : i32
    return %arg0, %c0_i32 : i32, i32
  }
  func.func @transform_1(%arg0: i32) -> (i32, i32) {
    %c0_i32 = arith.constant 0 : i32
    %c0_i32_0 = arith.constant 0 : i32
    %c0_i32_1 = arith.constant 0 : i32
    return %c0_i32, %c0_i32_0 : i32, i32
  }
  func.func @transform_2(%arg0: i32) -> (i32, i32) {
    %c0_i32 = arith.constant 0 : i32
    %c0_i32_0 = arith.constant 0 : i32
    %c0_i32_1 = arith.constant 0 : i32
    return %c0_i32, %c0_i32_0 : i32, i32
  }
  func.func @transform_3(%arg0: i32) -> (i32, i32) {
    %c0_i32 = arith.constant 0 : i32
    %c0_i32_0 = arith.constant 0 : i32
    %c0_i32_1 = arith.constant 0 : i32
    return %c0_i32, %c0_i32_0 : i32, i32
  }
  func.func @transform_4(%arg0: i32) -> (i32, i32) {
    %c0_i32 = arith.constant 0 : i32
    %c0_i32_0 = arith.constant 0 : i32
    %c0_i32_1 = arith.constant 0 : i32
    return %c0_i32, %c0_i32_0 : i32, i32
  }
  func.func @transform_5(%arg0: i32) -> (i32, i32) {
    %c0_i32 = arith.constant 0 : i32
    %c0_i32_0 = arith.constant 0 : i32
    %c0_i32_1 = arith.constant 0 : i32
    return %c0_i32, %c0_i32_0 : i32, i32
  }
  func.func @transform_6(%arg0: i32) -> (i32, i32) {
    %c0_i32 = arith.constant 0 : i32
    %c0_i32_0 = arith.constant 0 : i32
    %c0_i32_1 = arith.constant 0 : i32
    return %c0_i32, %c0_i32_0 : i32, i32
  }
  func.func @transform_7(%arg0: i32) -> (i32, i32) {
    %c0_i32 = arith.constant 0 : i32
    %c0_i32_0 = arith.constant 0 : i32
    return %arg0, %c0_i32 : i32, i32
  }
}

</mosaic_0001>

<llo_original>
// kernel: tpu_custom_call.1
$region0: #{tpu_custom_call.1}
  #allocation0 [shape = 'u32[]', space=smem, size = 0x4, offset = 0x4, fixed_abs, tag = 'smem constant byte address 0x4 - core index']
  #allocation1 [shape = 'u32[144,128]{1,0:T(1,128)}', space=vmem, size = 0x12000, scoped, tag = 'internal scratch']
  %s0 = inlined_call_operand.hbm [shape: f32[4,64], index: 0, kind: input, shape index: {}]
  %s1 = inlined_call_operand.hbm [shape: bf16[64,128], index: 1, kind: input, shape index: {}]
  %s2 = inlined_call_operand.vmem [shape: f32[1,128], index: 2, kind: input, shape index: {}]
  %s3 = inlined_call_operand.hbm [shape: bf16[128,128], index: 3, kind: input, shape index: {}]
  %s4 = inlined_call_operand.vmem [shape: f32[1,128], index: 4, kind: input, shape index: {}]
  %s5 = inlined_call_operand.hbm [shape: bf16[128,128], index: 5, kind: input, shape index: {}]
  %s6 = inlined_call_operand.vmem [shape: f32[1,128], index: 6, kind: input, shape index: {}]
  %s7 = inlined_call_operand.hbm [shape: f32[4,128], index: 7, kind: output, shape index: {}]
  %s8 = sld [smem:[#allocation0]]
  $region54: #{tpu_custom_call.1} parent=0
    _
  %s10 = ssub.s32 1, %s8
  %s11 = scalar_select 0, %s10, %s8
  $region1: #{tpu_custom_call.1} parent=0
    #allocation2 [shape = 'u8[2048]{0}', space=vmem, size = 0x800, scoped, tag = 'input window, operand 0, single buffered']
    #allocation3 [shape = 's32[1]{0}', space=sflag, size = 0x4, scoped, tag = 'scoped memory for tpu_custom_call.1']
    #allocation4 [shape = 's32[1]{0}', space=sflag, size = 0x4, scoped, tag = 'scoped memory for tpu_custom_call.1']
    #allocation5 [shape = 'u8[16384]{0}', space=vmem, size = 0x4000, scoped, tag = 'input window, operand 1, single buffered']
    #allocation6 [shape = 's32[1]{0}', space=sflag, size = 0x4, scoped, tag = 'scoped memory for tpu_custom_call.1']
    #allocation7 [shape = 'u8[32768]{0}', space=vmem, size = 0x8000, scoped, tag = 'input window, operand 3, single buffered']
    #allocation8 [shape = 'u8[32768]{0}', space=vmem, size = 0x8000, scoped, tag = 'input window, operand 5, single buffered']
    #allocation9 [shape = 's32[1]{0}', space=sflag, size = 0x4, scoped, tag = 'scoped memory for tpu_custom_call.1']
    #allocation10 [shape = 'u8[2048]{0}', space=vmem, size = 0x800, scoped, tag = 'output window, operand 0, single buffered']
    %12 = vsyncpa [#allocation3], 0
    %13 = vsyncpa [#allocation6], 0
    %14 = vsyncpa [#allocation9], 0
    %15 = vsyncpa [#allocation4], 0
    // Predicated region
    $region2: #{tpu_custom_call.1} parent=1 // pred_check
      _
    $region3: #{tpu_custom_call.1} parent=1 // pred_check_branch
      %17 = sbr.rel (0) target = $region5
    $region4: #{tpu_custom_call.1} parent=1 // pred_region
      %s19 = ssub.s32 64, 64
      %20 = vsyncadd [#allocation3], %s19
      %s22 = sshll.u32 [#allocation2], 4
      %s23 = int_to_ptr.vmem [resolvable:$true] %s22
      %25 = dma.hbm_to_vmem [thread:$0]  %s0, 64, %s23, [#allocation3]
    $region5: #{tpu_custom_call.1} parent=1 // pred_fallthru
      _
    // Predicated region
    $region6: #{tpu_custom_call.1} parent=1 // pred_check
      _
    $region7: #{tpu_custom_call.1} parent=1 // pred_check_branch
      %27 = sbr.rel (0) target = $region9
    $region8: #{tpu_custom_call.1} parent=1 // pred_region
      %s29 = ssub.s32 512, 512
      %30 = vsyncadd [#allocation6], %s29
      %s31 = sshll.u32 [#allocation5], 4
      %s32 = int_to_ptr.vmem [resolvable:$true] %s31
      %37 = dma.hbm_to_vmem [thread:$0]  %s1, 512, %s32, [#allocation6], 64, 64, 4
    $region9: #{tpu_custom_call.1} parent=1 // pred_fallthru
      _
    // Predicated region
    $region10: #{tpu_custom_call.1} parent=1 // pred_check
      _
    $region11: #{tpu_custom_call.1} parent=1 // pred_check_branch
      %39 = sbr.rel (0) target = $region13
    $region12: #{tpu_custom_call.1} parent=1 // pred_region
      _
    $region13: #{tpu_custom_call.1} parent=1 // pred_fallthru
      _
    // Predicated region
    $region14: #{tpu_custom_call.1} parent=1 // pred_check
      _
    $region15: #{tpu_custom_call.1} parent=1 // pred_check_branch
      %41 = sbr.rel (0) target = $region17
    $region16: #{tpu_custom_call.1} parent=1 // pred_region
      %s43 = ssub.s32 1024, 1024
      %44 = vsyncadd [#allocation6], %s43
      %s45 = sshll.u32 [#allocation7], 4
      %s46 = int_to_ptr.vmem [resolvable:$true] %s45
      %51 = dma.hbm_to_vmem [thread:$0]  %s3, 1024, %s46, [#allocation6], 64, 64, 4
    $region17: #{tpu_custom_call.1} parent=1 // pred_fallthru
      _
    // Predicated region
    $region18: #{tpu_custom_call.1} parent=1 // pred_check
      _
    $region19: #{tpu_custom_call.1} parent=1 // pred_check_branch
      %53 = sbr.rel (0) target = $region21
    $region20: #{tpu_custom_call.1} parent=1 // pred_region
      _
    $region21: #{tpu_custom_call.1} parent=1 // pred_fallthru
      _
    // Predicated region
    $region22: #{tpu_custom_call.1} parent=1 // pred_check
      _
    $region23: #{tpu_custom_call.1} parent=1 // pred_check_branch
      %55 = sbr.rel (0) target = $region25
    $region24: #{tpu_custom_call.1} parent=1 // pred_region
      %s57 = ssub.s32 1024, 1024
      %58 = vsyncadd [#allocation9], %s57
      %s59 = sshll.u32 [#allocation8], 4
      %s60 = int_to_ptr.vmem [resolvable:$true] %s59
      %65 = dma.hbm_to_vmem [thread:$0]  %s5, 1024, %s60, [#allocation9], 64, 64, 4
    $region25: #{tpu_custom_call.1} parent=1 // pred_fallthru
      _
    // Predicated region
    $region26: #{tpu_custom_call.1} parent=1 // pred_check
      _
    $region27: #{tpu_custom_call.1} parent=1 // pred_check_branch
      %67 = sbr.rel (0) target = $region29
    $region28: #{tpu_custom_call.1} parent=1 // pred_region
      _
    $region29: #{tpu_custom_call.1} parent=1 // pred_fallthru
      _
    // Predicated region
    $region30: #{tpu_custom_call.1} parent=1 // pred_check
      _
    $region31: #{tpu_custom_call.1} parent=1 // pred_check_branch
      %69 = sbr.rel (0) target = $region33
    $region32: #{tpu_custom_call.1} parent=1 // pred_region
      %70 = dma.done [#allocation3], 64
    $region33: #{tpu_custom_call.1} parent=1 // pred_fallthru
      _
    // Predicated region
    $region34: #{tpu_custom_call.1} parent=1 // pred_check
      _
    $region35: #{tpu_custom_call.1} parent=1 // pred_check_branch
      %72 = sbr.rel (0) target = $region37
    $region36: #{tpu_custom_call.1} parent=1 // pred_region
      %73 = dma.done [#allocation6], 512
    $region37: #{tpu_custom_call.1} parent=1 // pred_fallthru
      _
    // Predicated region
    $region38: #{tpu_custom_call.1} parent=1 // pred_check
      _
    $region39: #{tpu_custom_call.1} parent=1 // pred_check_branch
      %75 = sbr.rel (0) target = $region41
    $region40: #{tpu_custom_call.1} parent=1 // pred_region
      %76 = dma.done [#allocation6], 1024
    $region41: #{tpu_custom_call.1} parent=1 // pred_fallthru
      _
    // Predicated region
    $region42: #{tpu_custom_call.1} parent=1 // pred_check
      _
    $region43: #{tpu_custom_call.1} parent=1 // pred_check_branch
      %78 = sbr.rel (0) target = $region45
    $region44: #{tpu_custom_call.1} parent=1 // pred_region
      %79 = dma.done [#allocation9], 1024
    $region45: #{tpu_custom_call.1} parent=1 // pred_fallthru
      _
    %v81 = vld [vmem:[#allocation2] sm:$0xf]
    %v82 = vpack.c.bf16 %v81, %v81
    %v83 = vld [vmem:[#allocation5] sm:$0xf]
    %v84 = vld [vmem:[#allocation5 + $0x4] sm:$0xf]
    %v85 = vld [vmem:[#allocation5 + $0x8] sm:$0xf]
    %v86 = vld [vmem:[#allocation5 + $0xc] sm:$0xf]
    %v87 = vld [vmem:[#allocation5 + $0x10] sm:$0xf]
    %v88 = vld [vmem:[#allocation5 + $0x14] sm:$0xf]
    %v89 = vld [vmem:[#allocation5 + $0x18] sm:$0xf]
    %v90 = vld [vmem:[#allocation5 + $0x1c] sm:$0xf]
    %v91 = vld [vmem:[%s2] sm:$0x1]
    %v93 = vlaneseq
    %v94 = vshrl.u32 %v93, 7
    %v95 = vsub.s32 0, %v94
    %v96 = vrot.slane %v91, %v95
    %v106 = vunpack.c.l.b16 %v83
    %v107 = vunpack.c.l.b16 %v84
    %v108 = vunpack.c.l.b16 %v85
    %v109 = vunpack.c.l.b16 %v86
    %v110 = vunpack.c.l.b16 %v87
    %v111 = vunpack.c.l.b16 %v88
    %v112 = vunpack.c.l.b16 %v89
    %v113 = vunpack.c.l.b16 %v90
    %v114 = vpack.c.b16 %v107, %v106
    %v115 = vpack.c.b16 %v109, %v108
    %v116 = vpack.c.b16 %v111, %v110
    %v117 = vpack.c.b16 %v113, %v112
    %vm122 = vcmask 523264
    %v124 = vsel %vm122, %v82, 0
    %126 = vmatprep.subr.bf16.mxu0 0
    %127 = vmatpush1.bf16.msra.mxu0 0
    %128 = vmatprep.subr.bf16.mxu0 0
    %129 = vmatpush1.bf16.msra.mxu0 0
    %130 = vmatprep.subr.bf16.mxu0 0
    %131 = vmatpush1.bf16.msra.mxu0 0
    %132 = vmatprep.subr.bf16.mxu0 0
    %133 = vmatpush1.bf16.msra.mxu0 0
    %134 = vmatprep.subr.bf16.mxu0 0
    %135 = vmatpush1.bf16.msra.mxu0 %v117
    %136 = vmatprep.subr.bf16.mxu0 0
    %137 = vmatpush1.bf16.msra.mxu0 %v116
    %138 = vmatprep.subr.bf16.mxu0 0
    %139 = vmatpush1.bf16.msra.mxu0 %v115
    %140 = vmatprep.subr.bf16.mxu0 0
    %141 = vmatpush1.bf16.msra.mxu0 %v114
    %142 = vmatprep.subr.bf16.mxu0 0
    %143 = vmatpush2.bf16.msra.mxu0 0
    %144 = vmatprep.subr.bf16.mxu0 0
    %145 = vmatpush2.bf16.msra.mxu0 0
    %146 = vmatprep.subr.bf16.mxu0 0
    %147 = vmatpush2.bf16.msra.mxu0 0
    %148 = vmatprep.subr.bf16.mxu0 0
    %149 = vmatpush2.bf16.msra.mxu0 0
    %150 = vmatprep.subr.bf16.mxu0 0
    %151 = vmatpush2.bf16.msra.mxu0 0
    %152 = vmatprep.subr.bf16.mxu0 0
    %153 = vmatpush2.bf16.msra.mxu0 0
    %154 = vmatprep.subr.bf16.mxu0 0
    %155 = vmatpush2.bf16.msra.mxu0 0
    %156 = vmatprep.subr.bf16.mxu0 0
    %157 = vmatpush2.bf16.msra.mxu0 0
    %158 = vmatprep.mubr.bf16.mxu0 0
    %159 = vmatmul.mubr.bf16.gmra.mxu0 %v124
    %v160 = vpop.f32.mrf.mxu0
    %v161 = vadd.f32 %v96, %v160
    %v162 = vpop.f32.mrf.mxu0
    %v163 = vpop.f32.mrf.mxu0
    %v164 = vpop.f32.mrf.mxu0
    %165 = vdwg.mxu0
    %v166 = vmax.f32 %v161, 0.0
    %v167 = vpack.c.bf16 %v166, %v166
    %v168 = vld [vmem:[#allocation7] sm:$0xf]
    %v169 = vld [vmem:[#allocation7 + $0x4] sm:$0xf]
    %v170 = vld [vmem:[#allocation7 + $0x8] sm:$0xf]
    %v171 = vld [vmem:[#allocation7 + $0xc] sm:$0xf]
    %v172 = vld [vmem:[#allocation7 + $0x10] sm:$0xf]
    %v173 = vld [vmem:[#allocation7 + $0x14] sm:$0xf]
    %v174 = vld [vmem:[#allocation7 + $0x18] sm:$0xf]
    %v175 = vld [vmem:[#allocation7 + $0x1c] sm:$0xf]
    %v176 = vld [vmem:[#allocation7 + $0x20] sm:$0xf]
    %v177 = vld [vmem:[#allocation7 + $0x24] sm:$0xf]
    %v178 = vld [vmem:[#allocation7 + $0x28] sm:$0xf]
    %v179 = vld [vmem:[#allocation7 + $0x2c] sm:$0xf]
    %v180 = vld [vmem:[#allocation7 + $0x30] sm:$0xf]
    %v181 = vld [vmem:[#allocation7 + $0x34] sm:$0xf]
    %v182 = vld [vmem:[#allocation7 + $0x38] sm:$0xf]
    %v183 = vld [vmem:[#allocation7 + $0x3c] sm:$0xf]
    %v184 = vld [vmem:[%s4] sm:$0x1]
    %v186 = vlaneseq
    %v187 = vshrl.u32 %v186, 7
    %v188 = vsub.s32 0, %v187
    %v189 = vrot.slane %v184, %v188
    %v207 = vunpack.c.l.b16 %v168
    %v208 = vunpack.c.l.b16 %v169
    %v209 = vunpack.c.l.b16 %v170
    %v210 = vunpack.c.l.b16 %v171
    %v211 = vunpack.c.l.b16 %v172
    %v212 = vunpack.c.l.b16 %v173
    %v213 = vunpack.c.l.b16 %v174
    %v214 = vunpack.c.l.b16 %v175
    %v215 = vunpack.c.l.b16 %v176
    %v216 = vunpack.c.l.b16 %v177
    %v217 = vunpack.c.l.b16 %v178
    %v218 = vunpack.c.l.b16 %v179
    %v219 = vunpack.c.l.b16 %v180
    %v220 = vunpack.c.l.b16 %v181
    %v221 = vunpack.c.l.b16 %v182
    %v222 = vunpack.c.l.b16 %v183
    %v223 = vpack.c.b16 %v208, %v207
    %v224 = vpack.c.b16 %v210, %v209
    %v225 = vpack.c.b16 %v212, %v211
    %v226 = vpack.c.b16 %v214, %v213
    %v227 = vpack.c.b16 %v216, %v215
    %v228 = vpack.c.b16 %v218, %v217
    %v229 = vpack.c.b16 %v220, %v219
    %v230 = vpack.c.b16 %v222, %v221
    %239 = vmatprep.subr.bf16.mxu0 0
    %240 = vmatpush1.bf16.msra.mxu0 %v230
    %241 = vmatprep.subr.bf16.mxu0 0
    %242 = vmatpush1.bf16.msra.mxu0 %v229
    %243 = vmatprep.subr.bf16.mxu0 0
    %244 = vmatpush1.bf16.msra.mxu0 %v228
    %245 = vmatprep.subr.bf16.mxu0 0
    %246 = vmatpush1.bf16.msra.mxu0 %v227
    %247 = vmatprep.subr.bf16.mxu0 0
    %248 = vmatpush1.bf16.msra.mxu0 %v226
    %249 = vmatprep.subr.bf16.mxu0 0
    %250 = vmatpush1.bf16.msra.mxu0 %v225
    %251 = vmatprep.subr.bf16.mxu0 0
    %252 = vmatpush1.bf16.msra.mxu0 %v224
    %253 = vmatprep.subr.bf16.mxu0 0
    %254 = vmatpush1.bf16.msra.mxu0 %v223
    %255 = vmatprep.subr.bf16.mxu0 0
    %256 = vmatpush2.bf16.msra.mxu0 0
    %257 = vmatprep.subr.bf16.mxu0 0
    %258 = vmatpush2.bf16.msra.mxu0 0
    %259 = vmatprep.subr.bf16.mxu0 0
    %260 = vmatpush2.bf16.msra.mxu0 0
    %261 = vmatprep.subr.bf16.mxu0 0
    %262 = vmatpush2.bf16.msra.mxu0 0
    %263 = vmatprep.subr.bf16.mxu0 0
    %264 = vmatpush2.bf16.msra.mxu0 0
    %265 = vmatprep.subr.bf16.mxu0 0
    %266 = vmatpush2.bf16.msra.mxu0 0
    %267 = vmatprep.subr.bf16.mxu0 0
    %268 = vmatpush2.bf16.msra.mxu0 0
    %269 = vmatprep.subr.bf16.mxu0 0
    %270 = vmatpush2.bf16.msra.mxu0 0
    %271 = vmatprep.mubr.bf16.mxu0 0
    %272 = vmatmul.mubr.bf16.gmra.mxu0 %v167
    %v273 = vpop.f32.mrf.mxu0
    %v274 = vadd.f32 %v189, %v273
    %v275 = vpop.f32.mrf.mxu0
    %v276 = vpop.f32.mrf.mxu0
    %v277 = vpop.f32.mrf.mxu0
    %278 = vdwg.mxu0
    %v279 = vmax.f32 %v274, 0.0
    %v280 = vpack.c.bf16 %v279, %v279
    %v281 = vld [vmem:[#allocation8] sm:$0xf]
    %v282 = vld [vmem:[#allocation8 + $0x4] sm:$0xf]
    %v283 = vld [vmem:[#allocation8 + $0x8] sm:$0xf]
    %v284 = vld [vmem:[#allocation8 + $0xc] sm:$0xf]
    %v285 = vld [vmem:[#allocation8 + $0x10] sm:$0xf]
    %v286 = vld [vmem:[#allocation8 + $0x14] sm:$0xf]
    %v287 = vld [vmem:[#allocation8 + $0x18] sm:$0xf]
    %v288 = vld [vmem:[#allocation8 + $0x1c] sm:$0xf]
    %v289 = vld [vmem:[#allocation8 + $0x20] sm:$0xf]
    %v290 = vld [vmem:[#allocation8 + $0x24] sm:$0xf]
    %v291 = vld [vmem:[#allocation8 + $0x28] sm:$0xf]
    %v292 = vld [vmem:[#allocation8 + $0x2c] sm:$0xf]
    %v293 = vld [vmem:[#allocation8 + $0x30] sm:$0xf]
    %v294 = vld [vmem:[#allocation8 + $0x34] sm:$0xf]
    %v295 = vld [vmem:[#allocation8 + $0x38] sm:$0xf]
    %v296 = vld [vmem:[#allocation8 + $0x3c] sm:$0xf]
    %v297 = vld [vmem:[%s6] sm:$0x1]
    %v299 = vlaneseq
    %v300 = vshrl.u32 %v299, 7
    %v301 = vsub.s32 0, %v300
    %v302 = vrot.slane %v297, %v301
    %v320 = vunpack.c.l.b16 %v281
    %v321 = vunpack.c.l.b16 %v282
    %v322 = vunpack.c.l.b16 %v283
    %v323 = vunpack.c.l.b16 %v284
    %v324 = vunpack.c.l.b16 %v285
    %v325 = vunpack.c.l.b16 %v286
    %v326 = vunpack.c.l.b16 %v287
    %v327 = vunpack.c.l.b16 %v288
    %v328 = vunpack.c.l.b16 %v289
    %v329 = vunpack.c.l.b16 %v290
    %v330 = vunpack.c.l.b16 %v291
    %v331 = vunpack.c.l.b16 %v292
    %v332 = vunpack.c.l.b16 %v293
    %v333 = vunpack.c.l.b16 %v294
    %v334 = vunpack.c.l.b16 %v295
    %v335 = vunpack.c.l.b16 %v296
    %v336 = vpack.c.b16 %v321, %v320
    %v337 = vpack.c.b16 %v323, %v322
    %v338 = vpack.c.b16 %v325, %v324
    %v339 = vpack.c.b16 %v327, %v326
    %v340 = vpack.c.b16 %v329, %v328
    %v341 = vpack.c.b16 %v331, %v330
    %v342 = vpack.c.b16 %v333, %v332
    %v343 = vpack.c.b16 %v335, %v334
    %352 = vmatprep.subr.bf16.mxu0 0
    %353 = vmatpush1.bf16.msra.mxu0 %v343
    %354 = vmatprep.subr.bf16.mxu0 0
    %355 = vmatpush1.bf16.msra.mxu0 %v342
    %356 = vmatprep.subr.bf16.mxu0 0
    %357 = vmatpush1.bf16.msra.mxu0 %v341
    %358 = vmatprep.subr.bf16.mxu0 0
    %359 = vmatpush1.bf16.msra.mxu0 %v340
    %360 = vmatprep.subr.bf16.mxu0 0
    %361 = vmatpush1.bf16.msra.mxu0 %v339
    %362 = vmatprep.subr.bf16.mxu0 0
    %363 = vmatpush1.bf16.msra.mxu0 %v338
    %364 = vmatprep.subr.bf16.mxu0 0
    %365 = vmatpush1.bf16.msra.mxu0 %v337
    %366 = vmatprep.subr.bf16.mxu0 0
    %367 = vmatpush1.bf16.msra.mxu0 %v336
    %368 = vmatprep.subr.bf16.mxu0 0
    %369 = vmatpush2.bf16.msra.mxu0 0
    %370 = vmatprep.subr.bf16.mxu0 0
    %371 = vmatpush2.bf16.msra.mxu0 0
    %372 = vmatprep.subr.bf16.mxu0 0
    %373 = vmatpush2.bf16.msra.mxu0 0
    %374 = vmatprep.subr.bf16.mxu0 0
    %375 = vmatpush2.bf16.msra.mxu0 0
    %376 = vmatprep.subr.bf16.mxu0 0
    %377 = vmatpush2.bf16.msra.mxu0 0
    %378 = vmatprep.subr.bf16.mxu0 0
    %379 = vmatpush2.bf16.msra.mxu0 0
    %380 = vmatprep.subr.bf16.mxu0 0
    %381 = vmatpush2.bf16.msra.mxu0 0
    %382 = vmatprep.subr.bf16.mxu0 0
    %383 = vmatpush2.bf16.msra.mxu0 0
    %384 = vmatprep.mubr.bf16.mxu0 0
    %385 = vmatmul.mubr.bf16.gmra.mxu0 %v280
    %v386 = vpop.f32.mrf.mxu0
    %v387 = vadd.f32 %v302, %v386
    %v388 = vpop.f32.mrf.mxu0
    %v389 = vpop.f32.mrf.mxu0
    %v390 = vpop.f32.mrf.mxu0
    %391 = vdwg.mxu0
    %392 = vst [vmem:[#allocation10] sm:$0xf] %v387
    // Predicated region
    $region46: #{tpu_custom_call.1} parent=1 // pred_check
      _
    $region47: #{tpu_custom_call.1} parent=1 // pred_check_branch
      %394 = sbr.rel (0) target = $region49
    $region48: #{tpu_custom_call.1} parent=1 // pred_region
      %s396 = ssub.s32 64, 64
      %397 = vsyncadd [#allocation4], %s396
      %s399 = sshll.u32 [#allocation10], 4
      %s400 = int_to_ptr.vmem [resolvable:$true] %s399
      %402 = dma.vmem_to_hbm [thread:$0]  %s400, 64, %s7, [#allocation4]
    $region49: #{tpu_custom_call.1} parent=1 // pred_fallthru
      _
    // Predicated region
    $region50: #{tpu_custom_call.1} parent=1 // pred_check
      _
    $region51: #{tpu_custom_call.1} parent=1 // pred_check_branch
      %404 = sbr.rel (0) target = $region53
    $region52: #{tpu_custom_call.1} parent=1 // pred_region
      %405 = dma.done [#allocation4], 64
    $region53: #{tpu_custom_call.1} parent=1 // pred_fallthru
      _
    %406 = vsyncpa [#allocation3], 1
    %407 = vsyncpa [#allocation6], 1
    %408 = vsyncpa [#allocation9], 1
    %409 = vsyncpa [#allocation4], 1

// kernel: tpu_custom_call.1
$region0: #{tpu_custom_call.1}
  #allocation0 [shape = 'u32[]', space=smem, size = 0x4, offset = 0x4, fixed_abs, tag = 'smem constant byte address 0x4 - core index']
  #allocation1 [shape = 'u32[144,128]{1,0:T(1,128)}', space=vmem, size = 0x12000, scoped, tag = 'internal scratch']
  %s0 = inlined_call_operand.hbm [shape: f32[4,64], index: 0, kind: input, shape index: {}]
  %s1 = inlined_call_operand.hbm [shape: bf16[64,128], index: 1, kind: input, shape index: {}]
  %s2 = inlined_call_operand.vmem [shape: f32[1,128], index: 2, kind: input, shape index: {}]
  %s3 = inlined_call_operand.hbm [shape: bf16[128,128], index: 3, kind: input, shape index: {}]
  %s4 = inlined_call_operand.vmem [shape: f32[1,128], index: 4, kind: input, shape index: {}]
  %s5 = inlined_call_operand.hbm [shape: bf16[128,128], index: 5, kind: input, shape index: {}]
  %s6 = inlined_call_operand.vmem [shape: f32[1,128], index: 6, kind: input, shape index: {}]
  %s7 = inlined_call_operand.hbm [shape: f32[4,128], index: 7, kind: output, shape index: {}]
  %s8 = sld [smem:[#allocation0]]
  $region54: #{tpu_custom_call.1} parent=0
    _
  %s10 = ssub.s32 1, %s8
  %s11 = scalar_select 0, %s10, %s8
  $region1: #{tpu_custom_call.1} parent=0
    #allocation2 [shape = 'u8[2048]{0}', space=vmem, size = 0x800, scoped, tag = 'input window, operand 0, single buffered']
    #allocation3 [shape = 's32[1]{0}', space=sflag, size = 0x4, scoped, tag = 'scoped memory for tpu_custom_call.1']
    #allocation4 [shape = 's32[1]{0}', space=sflag, size = 0x4, scoped, tag = 'scoped memory for tpu_custom_call.1']
    #allocation5 [shape = 'u8[16384]{0}', space=vmem, size = 0x4000, scoped, tag = 'input window, operand 1, single buffered']
    #allocation6 [shape = 's32[1]{0}', space=sflag, size = 0x4, scoped, tag = 'scoped memory for tpu_custom_call.1']
    #allocation7 [shape = 'u8[32768]{0}', space=vmem, size = 0x8000, scoped, tag = 'input window, operand 3, single buffered']
    #allocation8 [shape = 'u8[32768]{0}', space=vmem, size = 0x8000, scoped, tag = 'input window, operand 5, single buffered']
    #allocation9 [shape = 's32[1]{0}', space=sflag, size = 0x4, scoped, tag = 'scoped memory for tpu_custom_call.1']
    #allocation10 [shape = 'u8[2048]{0}', space=vmem, size = 0x800, scoped, tag = 'output window, operand 0, single buffered']
    %12 = vsyncpa [#allocation3], 0
    %13 = vsyncpa [#allocation6], 0
    %14 = vsyncpa [#allocation9], 0
    %15 = vsyncpa [#allocation4], 0
    // Predicated region
    $region2: #{tpu_custom_call.1} parent=1 // pred_check
      _
    $region3: #{tpu_custom_call.1} parent=1 // pred_check_branch
      %17 = sbr.rel (0) target = $region5
    $region4: #{tpu_custom_call.1} parent=1 // pred_region
      %s19 = ssub.s32 64, 64
      %20 = vsyncadd [#allocation3], %s19
      %s22 = sshll.u32 [#allocation2], 4
      %s23 = int_to_ptr.vmem [resolvable:$true] %s22
      %25 = dma.hbm_to_vmem [thread:$0]  %s0, 64, %s23, [#allocation3]
    $region5: #{tpu_custom_call.1} parent=1 // pred_fallthru
      _
    // Predicated region
    $region6: #{tpu_custom_call.1} parent=1 // pred_check
      _
    $region7: #{tpu_custom_call.1} parent=1 // pred_check_branch
      %27 = sbr.rel (0) target = $region9
    $region8: #{tpu_custom_call.1} parent=1 // pred_region
      %s29 = ssub.s32 512, 512
      %30 = vsyncadd [#allocation6], %s29
      %s31 = sshll.u32 [#allocation5], 4
      %s32 = int_to_ptr.vmem [resolvable:$true] %s31
      %37 = dma.hbm_to_vmem [thread:$0]  %s1, 512, %s32, [#allocation6], 64, 64, 4
    $region9: #{tpu_custom_call.1} parent=1 // pred_fallthru
      _
    // Predicated region
    $region10: #{tpu_custom_call.1} parent=1 // pred_check
      _
    $region11: #{tpu_custom_call.1} parent=1 // pred_check_branch
      %39 = sbr.rel (0) target = $region13
    $region12: #{tpu_custom_call.1} parent=1 // pred_region
      _
    $region13: #{tpu_custom_call.1} parent=1 // pred_fallthru
      _
    // Predicated region
    $region14: #{tpu_custom_call.1} parent=1 // pred_check
      _
    $region15: #{tpu_custom_call.1} parent=1 // pred_check_branch
      %41 = sbr.rel (0) target = $region17
    $region16: #{tpu_custom_call.1} parent=1 // pred_region
      %s43 = ssub.s32 1024, 1024
      %44 = vsyncadd [#allocation6], %s43
      %s45 = sshll.u32 [#allocation7], 4
      %s46 = int_to_ptr.vmem [resolvable:$true] %s45
      %51 = dma.hbm_to_vmem [thread:$0]  %s3, 1024, %s46, [#allocation6], 64, 64, 4
    $region17: #{tpu_custom_call.1} parent=1 // pred_fallthru
      _
    // Predicated region
    $region18: #{tpu_custom_call.1} parent=1 // pred_check
      _
    $region19: #{tpu_custom_call.1} parent=1 // pred_check_branch
      %53 = sbr.rel (0) target = $region21
    $region20: #{tpu_custom_call.1} parent=1 // pred_region
      _
    $region21: #{tpu_custom_call.1} parent=1 // pred_fallthru
      _
    // Predicated region
    $region22: #{tpu_custom_call.1} parent=1 // pred_check
      _
    $region23: #{tpu_custom_call.1} parent=1 // pred_check_branch
      %55 = sbr.rel (0) target = $region25
    $region24: #{tpu_custom_call.1} parent=1 // pred_region
      %s57 = ssub.s32 1024, 1024
      %58 = vsyncadd [#allocation9], %s57
      %s59 = sshll.u32 [#allocation8], 4
      %s60 = int_to_ptr.vmem [resolvable:$true] %s59
      %65 = dma.hbm_to_vmem [thread:$0]  %s5, 1024, %s60, [#allocation9], 64, 64, 4
    $region25: #{tpu_custom_call.1} parent=1 // pred_fallthru
      _
    // Predicated region
    $region26: #{tpu_custom_call.1} parent=1 // pred_check
      _
    $region27: #{tpu_custom_call.1} parent=1 // pred_check_branch
      %67 = sbr.rel (0) target = $region29
    $region28: #{tpu_custom_call.1} parent=1 // pred_region
      _
    $region29: #{tpu_custom_call.1} parent=1 // pred_fallthru
      _
    // Predicated region
    $region30: #{tpu_custom_call.1} parent=1 // pred_check
      _
    $region31: #{tpu_custom_call.1} parent=1 // pred_check_branch
      %69 = sbr.rel (0) target = $region33
    $region32: #{tpu_custom_call.1} parent=1 // pred_region
      %70 = dma.done [#allocation3], 64
    $region33: #{tpu_custom_call.1} parent=1 // pred_fallthru
      _
    // Predicated region
    $region34: #{tpu_custom_call.1} parent=1 // pred_check
      _
    $region35: #{tpu_custom_call.1} parent=1 // pred_check_branch
      %72 = sbr.rel (0) target = $region37
    $region36: #{tpu_custom_call.1} parent=1 // pred_region
      %73 = dma.done [#allocation6], 512
    $region37: #{tpu_custom_call.1} parent=1 // pred_fallthru
      _
    // Predicated region
    $region38: #{tpu_custom_call.1} parent=1 // pred_check
      _
    $region39: #{tpu_custom_call.1} parent=1 // pred_check_branch
      %75 = sbr.rel (0) target = $region41
    $region40: #{tpu_custom_call.1} parent=1 // pred_region
      %76 = dma.done [#allocation6], 1024
    $region41: #{tpu_custom_call.1} parent=1 // pred_fallthru
      _
    // Predicated region
    $region42: #{tpu_custom_call.1} parent=1 // pred_check
      _
    $region43: #{tpu_custom_call.1} parent=1 // pred_check_branch
      %78 = sbr.rel (0) target = $region45
    $region44: #{tpu_custom_call.1} parent=1 // pred_region
      %79 = dma.done [#allocation9], 1024
    $region45: #{tpu_custom_call.1} parent=1 // pred_fallthru
      _
    %v81 = vld [vmem:[#allocation2] sm:$0xf]
    %v82 = vpack.c.bf16 %v81, %v81
    %v83 = vld [vmem:[#allocation5] sm:$0xf]
    %v84 = vld [vmem:[#allocation5 + $0x4] sm:$0xf]
    %v85 = vld [vmem:[#allocation5 + $0x8] sm:$0xf]
    %v86 = vld [vmem:[#allocation5 + $0xc] sm:$0xf]
    %v87 = vld [vmem:[#allocation5 + $0x10] sm:$0xf]
    %v88 = vld [vmem:[#allocation5 + $0x14] sm:$0xf]
    %v89 = vld [vmem:[#allocation5 + $0x18] sm:$0xf]
    %v90 = vld [vmem:[#allocation5 + $0x1c] sm:$0xf]
    %v91 = vld [vmem:[%s2] sm:$0x1]
    %v93 = vlaneseq
    %v94 = vshrl.u32 %v93, 7
    %v95 = vsub.s32 0, %v94
    %v96 = vrot.slane %v91, %v95
    %v106 = vunpack.c.l.b16 %v83
    %v107 = vunpack.c.l.b16 %v84
    %v108 = vunpack.c.l.b16 %v85
    %v109 = vunpack.c.l.b16 %v86
    %v110 = vunpack.c.l.b16 %v87
    %v111 = vunpack.c.l.b16 %v88
    %v112 = vunpack.c.l.b16 %v89
    %v113 = vunpack.c.l.b16 %v90
    %v114 = vpack.c.b16 %v107, %v106
    %v115 = vpack.c.b16 %v109, %v108
    %v116 = vpack.c.b16 %v111, %v110
    %v117 = vpack.c.b16 %v113, %v112
    %vm122 = vcmask 523264
    %v124 = vsel %vm122, %v82, 0
    %126 = vmatprep.subr.bf16.mxu0 0
    %127 = vmatpush1.bf16.msra.mxu0 0
    %128 = vmatprep.subr.bf16.mxu0 0
    %129 = vmatpush1.bf16.msra.mxu0 0
    %130 = vmatprep.subr.bf16.mxu0 0
    %131 = vmatpush1.bf16.msra.mxu0 0
    %132 = vmatprep.subr.bf16.mxu0 0
    %133 = vmatpush1.bf16.msra.mxu0 0
    %134 = vmatprep.subr.bf16.mxu0 0
    %135 = vmatpush1.bf16.msra.mxu0 %v117
    %136 = vmatprep.subr.bf16.mxu0 0
    %137 = vmatpush1.bf16.msra.mxu0 %v116
    %138 = vmatprep.subr.bf16.mxu0 0
    %139 = vmatpush1.bf16.msra.mxu0 %v115
    %140 = vmatprep.subr.bf16.mxu0 0
    %141 = vmatpush1.bf16.msra.mxu0 %v114
    %142 = vmatprep.subr.bf16.mxu0 0
    %143 = vmatpush2.bf16.msra.mxu0 0
    %144 = vmatprep.subr.bf16.mxu0 0
    %145 = vmatpush2.bf16.msra.mxu0 0
    %146 = vmatprep.subr.bf16.mxu0 0
    %147 = vmatpush2.bf16.msra.mxu0 0
    %148 = vmatprep.subr.bf16.mxu0 0
    %149 = vmatpush2.bf16.msra.mxu0 0
    %150 = vmatprep.subr.bf16.mxu0 0
    %151 = vmatpush2.bf16.msra.mxu0 0
    %152 = vmatprep.subr.bf16.mxu0 0
    %153 = vmatpush2.bf16.msra.mxu0 0
    %154 = vmatprep.subr.bf16.mxu0 0
    %155 = vmatpush2.bf16.msra.mxu0 0
    %156 = vmatprep.subr.bf16.mxu0 0
    %157 = vmatpush2.bf16.msra.mxu0 0
    %158 = vmatprep.mubr.bf16.mxu0 0
    %159 = vmatmul.mubr.bf16.gmra.mxu0 %v124
    %v160 = vpop.f32.mrf.mxu0
    %v161 = vadd.f32 %v96, %v160
    %v162 = vpop.f32.mrf.mxu0
    %v163 = vpop.f32.mrf.mxu0
    %v164 = vpop.f32.mrf.mxu0
    %165 = vdwg.mxu0
    %v166 = vmax.f32 %v161, 0.0
    %v167 = vpack.c.bf16 %v166, %v166
    %v168 = vld [vmem:[#allocation7] sm:$0xf]
    %v169 = vld [vmem:[#allocation7 + $0x4] sm:$0xf]
    %v170 = vld [vmem:[#allocation7 + $0x8] sm:$0xf]
    %v171 = vld [vmem:[#allocation7 + $0xc] sm:$0xf]
    %v172 = vld [vmem:[#allocation7 + $0x10] sm:$0xf]
    %v173 = vld [vmem:[#allocation7 + $0x14] sm:$0xf]
    %v174 = vld [vmem:[#allocation7 + $0x18] sm:$0xf]
    %v175 = vld [vmem:[#allocation7 + $0x1c] sm:$0xf]
    %v176 = vld [vmem:[#allocation7 + $0x20] sm:$0xf]
    %v177 = vld [vmem:[#allocation7 + $0x24] sm:$0xf]
    %v178 = vld [vmem:[#allocation7 + $0x28] sm:$0xf]
    %v179 = vld [vmem:[#allocation7 + $0x2c] sm:$0xf]
    %v180 = vld [vmem:[#allocation7 + $0x30] sm:$0xf]
    %v181 = vld [vmem:[#allocation7 + $0x34] sm:$0xf]
    %v182 = vld [vmem:[#allocation7 + $0x38] sm:$0xf]
    %v183 = vld [vmem:[#allocation7 + $0x3c] sm:$0xf]
    %v184 = vld [vmem:[%s4] sm:$0x1]
    %v186 = vlaneseq
    %v187 = vshrl.u32 %v186, 7
    %v188 = vsub.s32 0, %v187
    %v189 = vrot.slane %v184, %v188
    %v207 = vunpack.c.l.b16 %v168
    %v208 = vunpack.c.l.b16 %v169
    %v209 = vunpack.c.l.b16 %v170
    %v210 = vunpack.c.l.b16 %v171
    %v211 = vunpack.c.l.b16 %v172
    %v212 = vunpack.c.l.b16 %v173
    %v213 = vunpack.c.l.b16 %v174
    %v214 = vunpack.c.l.b16 %v175
    %v215 = vunpack.c.l.b16 %v176
    %v216 = vunpack.c.l.b16 %v177
    %v217 = vunpack.c.l.b16 %v178
    %v218 = vunpack.c.l.b16 %v179
    %v219 = vunpack.c.l.b16 %v180
    %v220 = vunpack.c.l.b16 %v181
    %v221 = vunpack.c.l.b16 %v182
    %v222 = vunpack.c.l.b16 %v183
    %v223 = vpack.c.b16 %v208, %v207
    %v224 = vpack.c.b16 %v210, %v209
    %v225 = vpack.c.b16 %v212, %v211
    %v226 = vpack.c.b16 %v214, %v213
    %v227 = vpack.c.b16 %v216, %v215
    %v228 = vpack.c.b16 %v218, %v217
    %v229 = vpack.c.b16 %v220, %v219
    %v230 = vpack.c.b16 %v222, %v221
    %239 = vmatprep.subr.bf16.mxu0 0
    %240 = vmatpush1.bf16.msra.mxu0 %v230
    %241 = vmatprep.subr.bf16.mxu0 0
    %242 = vmatpush1.bf16.msra.mxu0 %v229
    %243 = vmatprep.subr.bf16.mxu0 0
    %244 = vmatpush1.bf16.msra.mxu0 %v228
    %245 = vmatprep.subr.bf16.mxu0 0
    %246 = vmatpush1.bf16.msra.mxu0 %v227
    %247 = vmatprep.subr.bf16.mxu0 0
    %248 = vmatpush1.bf16.msra.mxu0 %v226
    %249 = vmatprep.subr.bf16.mxu0 0
    %250 = vmatpush1.bf16.msra.mxu0 %v225
    %251 = vmatprep.subr.bf16.mxu0 0
    %252 = vmatpush1.bf16.msra.mxu0 %v224
    %253 = vmatprep.subr.bf16.mxu0 0
    %254 = vmatpush1.bf16.msra.mxu0 %v223
    %255 = vmatprep.subr.bf16.mxu0 0
    %256 = vmatpush2.bf16.msra.mxu0 0
    %257 = vmatprep.subr.bf16.mxu0 0
    %258 = vmatpush2.bf16.msra.mxu0 0
    %259 = vmatprep.subr.bf16.mxu0 0
    %260 = vmatpush2.bf16.msra.mxu0 0
    %261 = vmatprep.subr.bf16.mxu0 0
    %262 = vmatpush2.bf16.msra.mxu0 0
    %263 = vmatprep.subr.bf16.mxu0 0
    %264 = vmatpush2.bf16.msra.mxu0 0
    %265 = vmatprep.subr.bf16.mxu0 0
    %266 = vmatpush2.bf16.msra.mxu0 0
    %267 = vmatprep.subr.bf16.mxu0 0
    %268 = vmatpush2.bf16.msra.mxu0 0
    %269 = vmatprep.subr.bf16.mxu0 0
    %270 = vmatpush2.bf16.msra.mxu0 0
    %271 = vmatprep.mubr.bf16.mxu0 0
    %272 = vmatmul.mubr.bf16.gmra.mxu0 %v167
    %v273 = vpop.f32.mrf.mxu0
    %v274 = vadd.f32 %v189, %v273
    %v275 = vpop.f32.mrf.mxu0
    %v276 = vpop.f32.mrf.mxu0
    %v277 = vpop.f32.mrf.mxu0
    %278 = vdwg.mxu0
    %v279 = vmax.f32 %v274, 0.0
    %v280 = vpack.c.bf16 %v279, %v279
    %v281 = vld [vmem:[#allocation8] sm:$0xf]
    %v282 = vld [vmem:[#allocation8 + $0x4] sm:$0xf]
    %v283 = vld [vmem:[#allocation8 + $0x8] sm:$0xf]
    %v284 = vld [vmem:[#allocation8 + $0xc] sm:$0xf]
    %v285 = vld [vmem:[#allocation8 + $0x10] sm:$0xf]
    %v286 = vld [vmem:[#allocation8 + $0x14] sm:$0xf]
    %v287 = vld [vmem:[#allocation8 + $0x18] sm:$0xf]
    %v288 = vld [vmem:[#allocation8 + $0x1c] sm:$0xf]
    %v289 = vld [vmem:[#allocation8 + $0x20] sm:$0xf]
    %v290 = vld [vmem:[#allocation8 + $0x24] sm:$0xf]
    %v291 = vld [vmem:[#allocation8 + $0x28] sm:$0xf]
    %v292 = vld [vmem:[#allocation8 + $0x2c] sm:$0xf]
    %v293 = vld [vmem:[#allocation8 + $0x30] sm:$0xf]
    %v294 = vld [vmem:[#allocation8 + $0x34] sm:$0xf]
    %v295 = vld [vmem:[#allocation8 + $0x38] sm:$0xf]
    %v296 = vld [vmem:[#allocation8 + $0x3c] sm:$0xf]
    %v297 = vld [vmem:[%s6] sm:$0x1]
    %v299 = vlaneseq
    %v300 = vshrl.u32 %v299, 7
    %v301 = vsub.s32 0, %v300
    %v302 = vrot.slane %v297, %v301
    %v320 = vunpack.c.l.b16 %v281
    %v321 = vunpack.c.l.b16 %v282
    %v322 = vunpack.c.l.b16 %v283
    %v323 = vunpack.c.l.b16 %v284
    %v324 = vunpack.c.l.b16 %v285
    %v325 = vunpack.c.l.b16 %v286
    %v326 = vunpack.c.l.b16 %v287
    %v327 = vunpack.c.l.b16 %v288
    %v328 = vunpack.c.l.b16 %v289
    %v329 = vunpack.c.l.b16 %v290
    %v330 = vunpack.c.l.b16 %v291
    %v331 = vunpack.c.l.b16 %v292
    %v332 = vunpack.c.l.b16 %v293
    %v333 = vunpack.c.l.b16 %v294
    %v334 = vunpack.c.l.b16 %v295
    %v335 = vunpack.c.l.b16 %v296
    %v336 = vpack.c.b16 %v321, %v320
    %v337 = vpack.c.b16 %v323, %v322
    %v338 = vpack.c.b16 %v325, %v324
    %v339 = vpack.c.b16 %v327, %v326
    %v340 = vpack.c.b16 %v329, %v328
    %v341 = vpack.c.b16 %v331, %v330
    %v342 = vpack.c.b16 %v333, %v332
    %v343 = vpack.c.b16 %v335, %v334
    %352 = vmatprep.subr.bf16.mxu0 0
    %353 = vmatpush1.bf16.msra.mxu0 %v343
    %354 = vmatprep.subr.bf16.mxu0 0
    %355 = vmatpush1.bf16.msra.mxu0 %v342
    %356 = vmatprep.subr.bf16.mxu0 0
    %357 = vmatpush1.bf16.msra.mxu0 %v341
    %358 = vmatprep.subr.bf16.mxu0 0
    %359 = vmatpush1.bf16.msra.mxu0 %v340
    %360 = vmatprep.subr.bf16.mxu0 0
    %361 = vmatpush1.bf16.msra.mxu0 %v339
    %362 = vmatprep.subr.bf16.mxu0 0
    %363 = vmatpush1.bf16.msra.mxu0 %v338
    %364 = vmatprep.subr.bf16.mxu0 0
    %365 = vmatpush1.bf16.msra.mxu0 %v337
    %366 = vmatprep.subr.bf16.mxu0 0
    %367 = vmatpush1.bf16.msra.mxu0 %v336
    %368 = vmatprep.subr.bf16.mxu0 0
    %369 = vmatpush2.bf16.msra.mxu0 0
    %370 = vmatprep.subr.bf16.mxu0 0
    %371 = vmatpush2.bf16.msra.mxu0 0
    %372 = vmatprep.subr.bf16.mxu0 0
    %373 = vmatpush2.bf16.msra.mxu0 0
    %374 = vmatprep.subr.bf16.mxu0 0
    %375 = vmatpush2.bf16.msra.mxu0 0
    %376 = vmatprep.subr.bf16.mxu0 0
    %377 = vmatpush2.bf16.msra.mxu0 0
    %378 = vmatprep.subr.bf16.mxu0 0
    %379 = vmatpush2.bf16.msra.mxu0 0
    %380 = vmatprep.subr.bf16.mxu0 0
    %381 = vmatpush2.bf16.msra.mxu0 0
    %382 = vmatprep.subr.bf16.mxu0 0
    %383 = vmatpush2.bf16.msra.mxu0 0
    %384 = vmatprep.mubr.bf16.mxu0 0
    %385 = vmatmul.mubr.bf16.gmra.mxu0 %v280
    %v386 = vpop.f32.mrf.mxu0
    %v387 = vadd.f32 %v302, %v386
    %v388 = vpop.f32.mrf.mxu0
    %v389 = vpop.f32.mrf.mxu0
    %v390 = vpop.f32.mrf.mxu0
    %391 = vdwg.mxu0
    %392 = vst [vmem:[#allocation10] sm:$0xf] %v387
    // Predicated region
    $region46: #{tpu_custom_call.1} parent=1 // pred_check
      _
    $region47: #{tpu_custom_call.1} parent=1 // pred_check_branch
      %394 = sbr.rel (0) target = $region49
    $region48: #{tpu_custom_call.1} parent=1 // pred_region
      %s396 = ssub.s32 64, 64
      %397 = vsyncadd [#allocation4], %s396
      %s399 = sshll.u32 [#allocation10], 4
      %s400 = int_to_ptr.vmem [resolvable:$true] %s399
      %402 = dma.vmem_to_hbm [thread:$0]  %s400, 64, %s7, [#allocation4]
    $region49: #{tpu_custom_call.1} parent=1 // pred_fallthru
      _
    // Predicated region
    $region50: #{tpu_custom_call.1} parent=1 // pred_check
      _
    $region51: #{tpu_custom_call.1} parent=1 // pred_check_branch
      %404 = sbr.rel (0) target = $region53
    $region52: #{tpu_custom_call.1} parent=1 // pred_region
      %405 = dma.done [#allocation4], 64
    $region53: #{tpu_custom_call.1} parent=1 // pred_fallthru
      _
    %406 = vsyncpa [#allocation3], 1
    %407 = vsyncpa [#allocation6], 1
    %408 = vsyncpa [#allocation9], 1
    %409 = vsyncpa [#allocation4], 1

</llo_original>
